<compile_context>
chip_gen: v7x
topology: tpu7x:2x2x1
jax: 0.10.0
libtpu: 0.0.40
codegen_flags: <defaults>
</compile_context>

<pallas_src>
import jax
import jax.numpy as jnp
from jax.experimental import pallas as pl
from jax.experimental.pallas import tpu as pltpu

STATE_DIM = 29
ACTION_DIM = 8
HIDDEN = 64

LANE = 128               # lane width: batch-tile sizes are multiples of this
MAX_TILE_N = 8192        # max batch rows per grid step
SPLIT_THRESHOLD = 2048   # below this, one block (step overhead > megacore gain)


def _round_up(x: int, m: int) -> int:
    return ((x + m - 1) // m) * m


def _cdiv(a: int, b: int) -> int:
    return -(-a // b)


def _choose_tiles(n: int):
    """Pick (tile_n, n_pad): tile_n | n_pad, tile_n multiple of LANE."""
    n_min = _round_up(max(n, 1), LANE)
    if n_min <= SPLIT_THRESHOLD:
        return n_min, n_min                      # single block
    # Even number of grid steps so v7x's two TensorCores both get work.
    steps = max(2, 2 * _cdiv(n_min, 2 * MAX_TILE_N))
    tile_n = _round_up(_cdiv(n_min, steps), LANE)
    n_pad = tile_n * _cdiv(n_min, tile_n)
    return tile_n, n_pad


def walker_policy_kernel(x_ref, w1_ref, b1_ref, w2_ref, b2_ref, w3_ref, b3_ref,
                         mu_ref):
    # x: (STATE_DIM, TILE_N) bf16 -- batch on lanes (lane-dense).
    x = x_ref[...]
    # Linear(state_dim, 64) + ReLU   (bf16 MXU operands, f32 accumulate)
    h1 = jnp.dot(w1_ref[...], x, preferred_element_type=jnp.float32) + b1_ref[...]
    h1 = jnp.maximum(h1, 0.0).astype(jnp.bfloat16)
    # Linear(64, 64) + ReLU
    h2 = jnp.dot(w2_ref[...], h1, preferred_element_type=jnp.float32) + b2_ref[...]
    h2 = jnp.maximum(h2, 0.0).astype(jnp.bfloat16)
    # Linear(64, action_dim): (8, TILE_N) f32 slab -> unmasked lane-dense stores.
    mu_ref[...] = (
        jnp.dot(w3_ref[...], h2, preferred_element_type=jnp.float32) + b3_ref[...]
    )


def walker_policy_forward(states, params, *, tile_n=None):
    """Returns (mu, sigma): mu is (N, action_dim) f32, sigma is (action_dim,) f32.

    sigma = exp(log_std) is state-independent, so it is returned as a single
    row; broadcast it to (N, action_dim) lazily only if a caller needs it dense.
    """
    n = states.shape[0]
    w1, b1, w2, b2, w3, b3, log_std = params

    if tile_n is None:
        tile_n, n_pad = _choose_tiles(n)
    else:
        tile_n = _round_up(tile_n, LANE)
        n_pad = tile_n * _cdiv(max(n, 1), tile_n)
    grid = (n_pad // tile_n,)

    # Feature-major layout: cast to bf16 and put the batch on the lane axis.
    x_t = jnp.transpose(states.astype(jnp.bfloat16))          # (STATE_DIM, n)
    x_t = jnp.pad(x_t, ((0, 0), (0, n_pad - n)))               # (STATE_DIM, n_pad)

    # PyTorch nn.Linear weights are already (out, in) == the LHS we need.
    w1b, w2b, w3b = (w.astype(jnp.bfloat16) for w in (w1, w2, w3))
    b1c, b2c, b3c = (b.astype(jnp.float32).reshape(-1, 1) for b in (b1, b2, b3))

    # Weights / biases: constant block index across the grid -> VMEM-resident.
    const = lambda a: pl.BlockSpec(a.shape, lambda i: (0, 0))

    mu_t = pl.pallas_call(
        walker_policy_kernel,
        out_shape=jax.ShapeDtypeStruct((ACTION_DIM, n_pad), jnp.float32),
        grid=grid,
        in_specs=[
            pl.BlockSpec((STATE_DIM, tile_n), lambda i: (0, i)),
            const(w1b), const(b1c),
            const(w2b), const(b2c),
            const(w3b), const(b3c),
        ],
        out_specs=pl.BlockSpec((ACTION_DIM, tile_n), lambda i: (0, i)),
        compiler_params=pltpu.CompilerParams(
            dimension_semantics=("parallel",),
            vmem_limit_bytes=48 * 1024 * 1024,
        ),
    )(x_t, w1b, b1c, w2b, b2c, w3b, b3c)

    mu = jnp.transpose(mu_t)[:n]            # (N, action_dim) f32
    sigma = jnp.exp(log_std)                # (action_dim,)
    return mu, sigma


def init_params(key):
    """Deterministic synthetic init, PyTorch nn.Linear conventions: W (out,in), b (out,)."""
    k1, k2, k3, k4, k5, k6 = jax.random.split(key, 6)
    w1 = jax.random.normal(k1, (HIDDEN, STATE_DIM), jnp.float32) * 0.1
    b1 = jax.random.normal(k2, (HIDDEN,), jnp.float32) * 0.01
    w2 = jax.random.normal(k3, (HIDDEN, HIDDEN), jnp.float32) * 0.1
    b2 = jax.random.normal(k4, (HIDDEN,), jnp.float32) * 0.01
    w3 = jax.random.normal(k5, (ACTION_DIM, HIDDEN), jnp.float32) * 0.1
    b3 = jax.random.normal(k6, (ACTION_DIM,), jnp.float32) * 0.01
    # self.log_std = nn.Parameter(torch.ones(action_dim) * -1.0)
    log_std = jnp.full((ACTION_DIM,), -1.0, jnp.float32)
    return (w1, b1, w2, b2, w3, b3, log_std)


def reference_forward(states, params):
    """Pure-JAX reference with the same bf16-operand / f32-accumulate math."""
    w1, b1, w2, b2, w3, b3, log_std = params
    bf = jnp.bfloat16
    x = states.astype(bf)
    h1 = jnp.maximum(
        jnp.dot(x, w1.astype(bf).T, preferred_element_type=jnp.float32) + b1, 0.0)
    h2 = jnp.maximum(
        jnp.dot(h1.astype(bf), w2.astype(bf).T, preferred_element_type=jnp.float32) + b2, 0.0)
    mu = jnp.dot(h2.astype(bf), w3.astype(bf).T, preferred_element_type=jnp.float32) + b3
    sigma = jnp.exp(log_std)
    return mu, sigma


if __name__ == "__main__":
    key = jax.random.PRNGKey(0)
    k_states, k_params, k_states2 = jax.random.split(key, 3)
    params = init_params(k_params)

    # Small batch (single grid step, padded batch lanes).
    N = 8
    states = jax.random.normal(k_states, (N, STATE_DIM), jnp.float32)
    fwd = jax.jit(lambda s, p: walker_policy_forward(s, p))
    mu, sigma = fwd(states, params)
    jax.block_until_ready((mu, sigma))
    mu_ref, sigma_ref = reference_forward(states, params)
    assert mu.shape == (N, ACTION_DIM) and sigma.shape == (ACTION_DIM,)
    assert jnp.allclose(mu, mu_ref, atol=1e-3, rtol=1e-3)
    assert jnp.allclose(sigma, sigma_ref, atol=1e-6, rtol=1e-6)

    # Multi-block grid path (padded, partial last tile) to exercise the
    # pipelined / megacore-shardable batch tiling used for large N.
    N2, TILE = 200, 128
    states2 = jax.random.normal(k_states2, (N2, STATE_DIM), jnp.float32)
    fwd2 = jax.jit(lambda s, p: walker_policy_forward(s, p, tile_n=TILE))
    mu2, sigma2 = fwd2(states2, params)
    jax.block_until_ready((mu2, sigma2))
    mu2_ref, sigma2_ref = reference_forward(states2, params)
    assert mu2.shape == (N2, ACTION_DIM)
    assert jnp.allclose(mu2, mu2_ref, atol=1e-3, rtol=1e-3)
    assert jnp.allclose(sigma2, sigma2_ref, atol=1e-6, rtol=1e-6)

    # TODO(synk): torch.distributions.Normal (sample / log_prob) is a
    # distribution-object utility, not part of the tensor forward pass; only
    # mu and sigma (= exp(log_std), state-independent row) are produced here.
    print("KERNEL_OK")
</pallas_src>

<mosaic_0001>
module attributes {stable_mosaic.version = 11 : i64} {
  func.func @walker_policy_kernel(%arg0: i32, %arg1: memref<29x128xbf16, #tpu.memory_space<vmem>>, %arg2: memref<64x29xbf16, #tpu.memory_space<vmem>>, %arg3: memref<64x1xf32, #tpu.memory_space<vmem>>, %arg4: memref<64x64xbf16, #tpu.memory_space<vmem>>, %arg5: memref<64x1xf32, #tpu.memory_space<vmem>>, %arg6: memref<8x64xbf16, #tpu.memory_space<vmem>>, %arg7: memref<8x1xf32, #tpu.memory_space<vmem>>, %arg8: memref<8x128xf32, #tpu.memory_space<vmem>>) attributes {dimension_semantics = [#tpu.dimension_semantics<parallel>], iteration_bounds = array<i64: 1>, scalar_prefetch = 0 : i64, scratch_operands = 0 : i64, tpu.core_type = #tpu.core_type<tc>, window_params = [{transform_indices = @transform_0, window_bounds = array<i64: 29, 128>}, {pipeline_mode = #tpu.pipeline_mode<synchronous>, transform_indices = @transform_1, window_bounds = array<i64: 64, 29>}, {pipeline_mode = #tpu.pipeline_mode<synchronous>, transform_indices = @transform_2, window_bounds = array<i64: 64, 1>}, {pipeline_mode = #tpu.pipeline_mode<synchronous>, transform_indices = @transform_3, window_bounds = array<i64: 64, 64>}, {pipeline_mode = #tpu.pipeline_mode<synchronous>, transform_indices = @transform_4, window_bounds = array<i64: 64, 1>}, {pipeline_mode = #tpu.pipeline_mode<synchronous>, transform_indices = @transform_5, window_bounds = array<i64: 8, 64>}, {pipeline_mode = #tpu.pipeline_mode<synchronous>, transform_indices = @transform_6, window_bounds = array<i64: 8, 1>}, {transform_indices = @transform_7, window_bounds = array<i64: 8, 128>}]} {
    %c0 = arith.constant 0 : index
    %c0_0 = arith.constant 0 : index
    %0 = vector.load %arg1[%c0, %c0_0] : memref<29x128xbf16, #tpu.memory_space<vmem>>, vector<29x128xbf16>
    %c0_1 = arith.constant 0 : index
    %c0_2 = arith.constant 0 : index
    %1 = vector.load %arg2[%c0_1, %c0_2] : memref<64x29xbf16, #tpu.memory_space<vmem>>, vector<64x29xbf16>
    %cst = arith.constant dense<0.000000e+00> : vector<64x128xf32>
    %2 = tpu.matmul %1, %0, %cst {dimension_numbers = #tpu.dot_dimension_numbers<[1], [0], [0], [1], [0, 0, 1, 1], [], []>} : vector<64x29xbf16>, vector<29x128xbf16>, vector<64x128xf32> -> vector<64x128xf32>
    %c0_3 = arith.constant 0 : index
    %c0_4 = arith.constant 0 : index
    %3 = vector.load %arg3[%c0_3, %c0_4] : memref<64x1xf32, #tpu.memory_space<vmem>>, vector<64x1xf32>
    %4 = vector.broadcast %3 : vector<64x1xf32> to vector<64x128xf32>
    %5 = arith.addf %2, %4 : vector<64x128xf32>
    %cst_5 = arith.constant 0.000000e+00 : f32
    %6 = vector.broadcast %cst_5 : f32 to vector<64x128xf32>
    %7 = arith.maximumf %5, %6 : vector<64x128xf32>
    %8 = arith.truncf %7 : vector<64x128xf32> to vector<64x128xbf16>
    %c0_6 = arith.constant 0 : index
    %c0_7 = arith.constant 0 : index
    %9 = vector.load %arg4[%c0_6, %c0_7] : memref<64x64xbf16, #tpu.memory_space<vmem>>, vector<64x64xbf16>
    %cst_8 = arith.constant dense<0.000000e+00> : vector<64x128xf32>
    %10 = tpu.matmul %9, %8, %cst_8 {dimension_numbers = #tpu.dot_dimension_numbers<[1], [0], [0], [1], [0, 0, 1, 1], [], []>} : vector<64x64xbf16>, vector<64x128xbf16>, vector<64x128xf32> -> vector<64x128xf32>
    %c0_9 = arith.constant 0 : index
    %c0_10 = arith.constant 0 : index
    %11 = vector.load %arg5[%c0_9, %c0_10] : memref<64x1xf32, #tpu.memory_space<vmem>>, vector<64x1xf32>
    %12 = vector.broadcast %11 : vector<64x1xf32> to vector<64x128xf32>
    %13 = arith.addf %10, %12 : vector<64x128xf32>
    %cst_11 = arith.constant 0.000000e+00 : f32
    %14 = vector.broadcast %cst_11 : f32 to vector<64x128xf32>
    %15 = arith.maximumf %13, %14 : vector<64x128xf32>
    %16 = arith.truncf %15 : vector<64x128xf32> to vector<64x128xbf16>
    %c0_12 = arith.constant 0 : index
    %c0_13 = arith.constant 0 : index
    %17 = vector.load %arg6[%c0_12, %c0_13] : memref<8x64xbf16, #tpu.memory_space<vmem>>, vector<8x64xbf16>
    %cst_14 = arith.constant dense<0.000000e+00> : vector<8x128xf32>
    %18 = tpu.matmul %17, %16, %cst_14 {dimension_numbers = #tpu.dot_dimension_numbers<[1], [0], [0], [1], [0, 0, 1, 1], [], []>} : vector<8x64xbf16>, vector<64x128xbf16>, vector<8x128xf32> -> vector<8x128xf32>
    %c0_15 = arith.constant 0 : index
    %c0_16 = arith.constant 0 : index
    %19 = vector.load %arg7[%c0_15, %c0_16] : memref<8x1xf32, #tpu.memory_space<vmem>>, vector<8x1xf32>
    %20 = vector.broadcast %19 : vector<8x1xf32> to vector<8x128xf32>
    %21 = arith.addf %18, %20 : vector<8x128xf32>
    %c0_17 = arith.constant 0 : index
    %c0_18 = arith.constant 0 : index
    %22 = vector.load %arg8[%c0_17, %c0_18] : memref<8x128xf32, #tpu.memory_space<vmem>>, vector<8x128xf32>
    tpu.vector_store %arg8[%c0_17, %c0_18], %21 {strides = array<i32>} : memref<8x128xf32, #tpu.memory_space<vmem>>, vector<8x128xf32>,
    return
  }
  func.func @transform_0(%arg0: i32) -> (i32, i32) {
    %c0_i32 = arith.constant 0 : i32
    %c0_i32_0 = arith.constant 0 : i32
    return %c0_i32, %arg0 : i32, i32
  }
  func.func @transform_1(%arg0: i32) -> (i32, i32) {
    %c0_i32 = arith.constant 0 : i32
    %c0_i32_0 = arith.constant 0 : i32
    %c0_i32_1 = arith.constant 0 : i32
    return %c0_i32, %c0_i32_0 : i32, i32
  }
  func.func @transform_2(%arg0: i32) -> (i32, i32) {
    %c0_i32 = arith.constant 0 : i32
    %c0_i32_0 = arith.constant 0 : i32
    %c0_i32_1 = arith.constant 0 : i32
    return %c0_i32, %c0_i32_0 : i32, i32
  }
  func.func @transform_3(%arg0: i32) -> (i32, i32) {
    %c0_i32 = arith.constant 0 : i32
    %c0_i32_0 = arith.constant 0 : i32
    %c0_i32_1 = arith.constant 0 : i32
    return %c0_i32, %c0_i32_0 : i32, i32
  }
  func.func @transform_4(%arg0: i32) -> (i32, i32) {
    %c0_i32 = arith.constant 0 : i32
    %c0_i32_0 = arith.constant 0 : i32
    %c0_i32_1 = arith.constant 0 : i32
    return %c0_i32, %c0_i32_0 : i32, i32
  }
  func.func @transform_5(%arg0: i32) -> (i32, i32) {
    %c0_i32 = arith.constant 0 : i32
    %c0_i32_0 = arith.constant 0 : i32
    %c0_i32_1 = arith.constant 0 : i32
    return %c0_i32, %c0_i32_0 : i32, i32
  }
  func.func @transform_6(%arg0: i32) -> (i32, i32) {
    %c0_i32 = arith.constant 0 : i32
    %c0_i32_0 = arith.constant 0 : i32
    %c0_i32_1 = arith.constant 0 : i32
    return %c0_i32, %c0_i32_0 : i32, i32
  }
  func.func @transform_7(%arg0: i32) -> (i32, i32) {
    %c0_i32 = arith.constant 0 : i32
    %c0_i32_0 = arith.constant 0 : i32
    return %c0_i32, %arg0 : i32, i32
  }
}

</mosaic_0001>

<llo_original>
// kernel: _lambda_.1
$region0: #{_lambda_.1}
  #allocation0 [shape = 'u32[]', space=smem, size = 0x4, offset = 0x4, fixed_abs, tag = 'smem constant byte address 0x4 - core index']
  #allocation1 [shape = 'u32[144,128]{1,0:T(1,128)}', space=vmem, size = 0x12000, scoped, tag = 'internal scratch']
  %s0 = inlined_call_operand.vmem [shape: bf16[29,128], index: 0, kind: input, shape index: {}]
  %s1 = inlined_call_operand.vmem [shape: bf16[64,29], index: 1, kind: input, shape index: {}]
  %s2 = inlined_call_operand.vmem [shape: f32[64,1], index: 2, kind: input, shape index: {}]
  %s3 = inlined_call_operand.vmem [shape: bf16[64,64], index: 3, kind: input, shape index: {}]
  %s4 = inlined_call_operand.vmem [shape: f32[64,1], index: 4, kind: input, shape index: {}]
  %s5 = inlined_call_operand.vmem [shape: bf16[8,64], index: 5, kind: input, shape index: {}]
  %s6 = inlined_call_operand.vmem [shape: f32[8,1], index: 6, kind: input, shape index: {}]
  %s7 = inlined_call_operand.vmem [shape: f32[8,128], index: 7, kind: output, shape index: {}]
  %s8 = sld [smem:[#allocation0]]
  $region38: #{_lambda_.1} parent=0
    _
  %s10 = ssub.s32 1, %s8
  %s11 = scalar_select 0, %s10, %s8
  // Predicated region
  $region2: #{_lambda_.1} parent=0 // pred_check
    _
  $region3: #{_lambda_.1} parent=0 // pred_check_branch
    %13 = sbr.rel (0) target = $region5
  $region4: #{_lambda_.1} parent=0 // pred_region
    _
  $region5: #{_lambda_.1} parent=0 // pred_fallthru
    _
  // Predicated region
  $region6: #{_lambda_.1} parent=0 // pred_check
    _
  $region7: #{_lambda_.1} parent=0 // pred_check_branch
    %15 = sbr.rel (0) target = $region9
  $region8: #{_lambda_.1} parent=0 // pred_region
    _
  $region9: #{_lambda_.1} parent=0 // pred_fallthru
    _
  // Predicated region
  $region10: #{_lambda_.1} parent=0 // pred_check
    _
  $region11: #{_lambda_.1} parent=0 // pred_check_branch
    %17 = sbr.rel (0) target = $region13
  $region12: #{_lambda_.1} parent=0 // pred_region
    _
  $region13: #{_lambda_.1} parent=0 // pred_fallthru
    _
  // Predicated region
  $region14: #{_lambda_.1} parent=0 // pred_check
    _
  $region15: #{_lambda_.1} parent=0 // pred_check_branch
    %19 = sbr.rel (0) target = $region17
  $region16: #{_lambda_.1} parent=0 // pred_region
    _
  $region17: #{_lambda_.1} parent=0 // pred_fallthru
    _
  // Predicated region
  $region18: #{_lambda_.1} parent=0 // pred_check
    _
  $region19: #{_lambda_.1} parent=0 // pred_check_branch
    %21 = sbr.rel (0) target = $region21
  $region20: #{_lambda_.1} parent=0 // pred_region
    _
  $region21: #{_lambda_.1} parent=0 // pred_fallthru
    _
  // Predicated region
  $region22: #{_lambda_.1} parent=0 // pred_check
    _
  $region23: #{_lambda_.1} parent=0 // pred_check_branch
    %23 = sbr.rel (0) target = $region25
  $region24: #{_lambda_.1} parent=0 // pred_region
    _
  $region25: #{_lambda_.1} parent=0 // pred_fallthru
    _
  // Predicated region
  $region26: #{_lambda_.1} parent=0 // pred_check
    _
  $region27: #{_lambda_.1} parent=0 // pred_check_branch
    %25 = sbr.rel (0) target = $region29
  $region28: #{_lambda_.1} parent=0 // pred_region
    _
  $region29: #{_lambda_.1} parent=0 // pred_fallthru
    _
  %v27 = vld [vmem:[%s0] sm:$0xf]
  %v28 = vld [vmem:[%s0 + $0x4] sm:$0xf]
  %v29 = vld [vmem:[%s0 + $0x8] sm:$0xf]
  %v30 = vld [vmem:[%s0 + $0xc] sm:$0x7]
  %v31 = vld [vmem:[%s1] sm:$0xf]
  %v32 = vld [vmem:[%s1 + $0x4] sm:$0xf]
  %v33 = vld [vmem:[%s1 + $0x8] sm:$0xf]
  %v34 = vld [vmem:[%s1 + $0xc] sm:$0xf]
  %v35 = vld [vmem:[%s1 + $0x10] sm:$0xf]
  %v36 = vld [vmem:[%s1 + $0x14] sm:$0xf]
  %v37 = vld [vmem:[%s1 + $0x18] sm:$0xf]
  %v38 = vld [vmem:[%s1 + $0x1c] sm:$0xf]
  %v39 = vld [vmem:[%s2] sm:$0xff]
  %v40 = vld [vmem:[%s2 + $0x8] sm:$0xff]
  %v41 = vld [vmem:[%s2 + $0x10] sm:$0xff]
  %v42 = vld [vmem:[%s2 + $0x18] sm:$0xff]
  %v43 = vld [vmem:[%s2 + $0x20] sm:$0xff]
  %v44 = vld [vmem:[%s2 + $0x28] sm:$0xff]
  %v45 = vld [vmem:[%s2 + $0x30] sm:$0xff]
  %v46 = vld [vmem:[%s2 + $0x38] sm:$0xff]
  %48 = vset.pattern.permute.xlu0 0
  %49 = vperm.xlu0 %48, %v39
  %v50 = vpop.permute.xlu0 %49
  %53 = vset.pattern.permute.xlu0 0
  %54 = vperm.xlu0 %53, %v40
  %v55 = vpop.permute.xlu0 %54
  %58 = vset.pattern.permute.xlu0 0
  %59 = vperm.xlu0 %58, %v41
  %v60 = vpop.permute.xlu0 %59
  %63 = vset.pattern.permute.xlu0 0
  %64 = vperm.xlu0 %63, %v42
  %v65 = vpop.permute.xlu0 %64
  %68 = vset.pattern.permute.xlu0 0
  %69 = vperm.xlu0 %68, %v43
  %v70 = vpop.permute.xlu0 %69
  %73 = vset.pattern.permute.xlu0 0
  %74 = vperm.xlu0 %73, %v44
  %v75 = vpop.permute.xlu0 %74
  %78 = vset.pattern.permute.xlu0 0
  %79 = vperm.xlu0 %78, %v45
  %v80 = vpop.permute.xlu0 %79
  %83 = vset.pattern.permute.xlu0 0
  %84 = vperm.xlu0 %83, %v46
  %v85 = vpop.permute.xlu0 %84
  %v95 = vunpack.c.l.b16 %v31
  %v96 = vunpack.c.l.b16 %v32
  %v97 = vunpack.c.l.b16 %v33
  %v98 = vunpack.c.l.b16 %v34
  %v99 = vunpack.c.l.b16 %v35
  %v100 = vunpack.c.l.b16 %v36
  %v101 = vunpack.c.l.b16 %v37
  %v102 = vunpack.c.l.b16 %v38
  %v103 = vpack.c.b16 %v96, %v95
  %v104 = vpack.c.b16 %v98, %v97
  %v105 = vpack.c.b16 %v100, %v99
  %v106 = vpack.c.b16 %v102, %v101
  %v111 = vunpack.c.l.b16 %v27
  %v112 = vunpack.c.l.b16 %v28
  %v113 = vunpack.c.l.b16 %v29
  %v114 = vunpack.c.l.b16 %v30
  %v115 = vpack.c.b16 %v112, %v111
  %v116 = vpack.c.b16 %v114, %v113
  %vm118 = vcmask 236544
  %v120 = vsel %vm118, %v103, 0
  %v123 = vsel %vm118, %v104, 0
  %v126 = vsel %vm118, %v105, 0
  %v129 = vsel %vm118, %v106, 0
  %vm131 = vcmask 1045504
  %vm132 = vcmask 1046528
  %v133 = vsel %vm131, 4294967295, 65535
  %v134 = vsel %vm132, %v133, 0
  %v136 = vand.u32 %v116, %v134
  %138 = vmatprep.subr.bf16.mxu0 0
  %139 = vmatpush1.bf16.msra.mxu0 %v115
  %140 = vmatprep.subr.bf16.mxu0 0
  %141 = vmatpush1.bf16.msra.mxu0 %v136
  %142 = vmatprep.subr.bf16.mxu0 0
  %143 = vmatpush1.bf16.msra.mxu0 0
  %144 = vmatprep.subr.bf16.mxu0 0
  %145 = vmatpush1.bf16.msra.mxu0 0
  %146 = vmatprep.subr.bf16.mxu0 0
  %147 = vmatpush1.bf16.msra.mxu0 0
  %148 = vmatprep.subr.bf16.mxu0 0
  %149 = vmatpush1.bf16.msra.mxu0 0
  %150 = vmatprep.subr.bf16.mxu0 0
  %151 = vmatpush1.bf16.msra.mxu0 0
  %152 = vmatprep.subr.bf16.mxu0 0
  %153 = vmatpush1.bf16.msra.mxu0 0
  %154 = vmatprep.subr.bf16.mxu0 0
  %155 = vmatpush1.bf16.msra.mxu0 0
  %156 = vmatprep.subr.bf16.mxu0 0
  %157 = vmatpush1.bf16.msra.mxu0 0
  %158 = vmatprep.subr.bf16.mxu0 0
  %159 = vmatpush1.bf16.msra.mxu0 0
  %160 = vmatprep.subr.bf16.mxu0 0
  %161 = vmatpush1.bf16.msra.mxu0 0
  %162 = vmatprep.subr.bf16.mxu0 0
  %163 = vmatpush1.bf16.msra.mxu0 0
  %164 = vmatprep.subr.bf16.mxu0 0
  %165 = vmatpush1.bf16.msra.mxu0 0
  %166 = vmatprep.subr.bf16.mxu0 0
  %167 = vmatpush1.bf16.msra.mxu0 0
  %168 = vmatprep.subr.bf16.mxu0 0
  %169 = vmatpush1.bf16.msra.mxu0 0
  %170 = vmatprep.mubr.bf16.mxu0 0
  %171 = vmatmul.mubr.bf16.gmra.mrb[0].mxu0 %v120
  %v172 = vpop.f32.mrb[0].mxu0
  %v173 = vadd.f32 %v50, %v172
  %v174 = vpop.f32.mrb[0].mxu0
  %v175 = vpop.f32.mrb[0].mxu0
  %v176 = vadd.f32 %v55, %v175
  %v177 = vpop.f32.mrb[0].mxu0
  %178 = vmatprep.mubr.bf16.mxu0 0
  %179 = vmatmul.mubr.bf16.gmra.mrb[0].mxu0 %v123
  %v180 = vpop.f32.mrb[0].mxu0
  %v181 = vadd.f32 %v60, %v180
  %v182 = vpop.f32.mrb[0].mxu0
  %v183 = vpop.f32.mrb[0].mxu0
  %v184 = vadd.f32 %v65, %v183
  %v185 = vpop.f32.mrb[0].mxu0
  %186 = vmatprep.mubr.bf16.mxu0 0
  %187 = vmatmul.mubr.bf16.gmra.mrb[0].mxu0 %v126
  %v188 = vpop.f32.mrb[0].mxu0
  %v189 = vadd.f32 %v70, %v188
  %v190 = vpop.f32.mrb[0].mxu0
  %v191 = vpop.f32.mrb[0].mxu0
  %v192 = vadd.f32 %v75, %v191
  %v193 = vpop.f32.mrb[0].mxu0
  %194 = vmatprep.mubr.bf16.mxu0 0
  %195 = vmatmul.mubr.bf16.gmra.mrb[0].mxu0 %v129
  %v196 = vpop.f32.mrb[0].mxu0
  %v197 = vadd.f32 %v80, %v196
  %v198 = vpop.f32.mrb[0].mxu0
  %v199 = vpop.f32.mrb[0].mxu0
  %v200 = vadd.f32 %v85, %v199
  %v201 = vpop.f32.mrb[0].mxu0
  %202 = vdwg.mxu0
  %v203 = vmax.f32 %v173, 0.0
  %v204 = vmax.f32 %v176, 0.0
  %v205 = vmax.f32 %v181, 0.0
  %v206 = vmax.f32 %v184, 0.0
  %v207 = vmax.f32 %v189, 0.0
  %v208 = vmax.f32 %v192, 0.0
  %v209 = vmax.f32 %v197, 0.0
  %v210 = vmax.f32 %v200, 0.0
  %v211 = vpack.c.bf16 %v204, %v203
  %v212 = vpack.c.bf16 %v206, %v205
  %v213 = vpack.c.bf16 %v208, %v207
  %v214 = vpack.c.bf16 %v210, %v209
  %v215 = vld [vmem:[%s3] sm:$0xf]
  %v216 = vld [vmem:[%s3 + $0x4] sm:$0xf]
  %v217 = vld [vmem:[%s3 + $0x8] sm:$0xf]
  %v218 = vld [vmem:[%s3 + $0xc] sm:$0xf]
  %v219 = vld [vmem:[%s3 + $0x10] sm:$0xf]
  %v220 = vld [vmem:[%s3 + $0x14] sm:$0xf]
  %v221 = vld [vmem:[%s3 + $0x18] sm:$0xf]
  %v222 = vld [vmem:[%s3 + $0x1c] sm:$0xf]
  %v223 = vld [vmem:[%s4] sm:$0xff]
  %v224 = vld [vmem:[%s4 + $0x8] sm:$0xff]
  %v225 = vld [vmem:[%s4 + $0x10] sm:$0xff]
  %v226 = vld [vmem:[%s4 + $0x18] sm:$0xff]
  %v227 = vld [vmem:[%s4 + $0x20] sm:$0xff]
  %v228 = vld [vmem:[%s4 + $0x28] sm:$0xff]
  %v229 = vld [vmem:[%s4 + $0x30] sm:$0xff]
  %v230 = vld [vmem:[%s4 + $0x38] sm:$0xff]
  %232 = vset.pattern.permute.xlu0 0
  %233 = vperm.xlu0 %232, %v223
  %v234 = vpop.permute.xlu0 %233
  %237 = vset.pattern.permute.xlu0 0
  %238 = vperm.xlu0 %237, %v224
  %v239 = vpop.permute.xlu0 %238
  %242 = vset.pattern.permute.xlu0 0
  %243 = vperm.xlu0 %242, %v225
  %v244 = vpop.permute.xlu0 %243
  %247 = vset.pattern.permute.xlu0 0
  %248 = vperm.xlu0 %247, %v226
  %v249 = vpop.permute.xlu0 %248
  %252 = vset.pattern.permute.xlu0 0
  %253 = vperm.xlu0 %252, %v227
  %v254 = vpop.permute.xlu0 %253
  %257 = vset.pattern.permute.xlu0 0
  %258 = vperm.xlu0 %257, %v228
  %v259 = vpop.permute.xlu0 %258
  %262 = vset.pattern.permute.xlu0 0
  %263 = vperm.xlu0 %262, %v229
  %v264 = vpop.permute.xlu0 %263
  %267 = vset.pattern.permute.xlu0 0
  %268 = vperm.xlu0 %267, %v230
  %v269 = vpop.permute.xlu0 %268
  %v279 = vunpack.c.l.b16 %v215
  %v280 = vunpack.c.l.b16 %v216
  %v281 = vunpack.c.l.b16 %v217
  %v282 = vunpack.c.l.b16 %v218
  %v283 = vunpack.c.l.b16 %v219
  %v284 = vunpack.c.l.b16 %v220
  %v285 = vunpack.c.l.b16 %v221
  %v286 = vunpack.c.l.b16 %v222
  %v287 = vpack.c.b16 %v280, %v279
  %v288 = vpack.c.b16 %v282, %v281
  %v289 = vpack.c.b16 %v284, %v283
  %v290 = vpack.c.b16 %v286, %v285
  %vm291 = vcmask 523264
  %v293 = vsel %vm291, %v287, 0
  %v296 = vsel %vm291, %v288, 0
  %v299 = vsel %vm291, %v289, 0
  %v302 = vsel %vm291, %v290, 0
  %304 = vmatprep.subr.bf16.mxu0 0
  %305 = vmatpush1.bf16.msra.mxu0 %v211
  %306 = vmatprep.subr.bf16.mxu0 0
  %307 = vmatpush1.bf16.msra.mxu0 %v212
  %308 = vmatprep.subr.bf16.mxu0 0
  %309 = vmatpush1.bf16.msra.mxu0 %v213
  %310 = vmatprep.subr.bf16.mxu0 0
  %311 = vmatpush1.bf16.msra.mxu0 %v214
  %312 = vmatprep.subr.bf16.mxu0 0
  %313 = vmatpush1.bf16.msra.mxu0 0
  %314 = vmatprep.subr.bf16.mxu0 0
  %315 = vmatpush1.bf16.msra.mxu0 0
  %316 = vmatprep.subr.bf16.mxu0 0
  %317 = vmatpush1.bf16.msra.mxu0 0
  %318 = vmatprep.subr.bf16.mxu0 0
  %319 = vmatpush1.bf16.msra.mxu0 0
  %320 = vmatprep.subr.bf16.mxu0 0
  %321 = vmatpush1.bf16.msra.mxu0 0
  %322 = vmatprep.subr.bf16.mxu0 0
  %323 = vmatpush1.bf16.msra.mxu0 0
  %324 = vmatprep.subr.bf16.mxu0 0
  %325 = vmatpush1.bf16.msra.mxu0 0
  %326 = vmatprep.subr.bf16.mxu0 0
  %327 = vmatpush1.bf16.msra.mxu0 0
  %328 = vmatprep.subr.bf16.mxu0 0
  %329 = vmatpush1.bf16.msra.mxu0 0
  %330 = vmatprep.subr.bf16.mxu0 0
  %331 = vmatpush1.bf16.msra.mxu0 0
  %332 = vmatprep.subr.bf16.mxu0 0
  %333 = vmatpush1.bf16.msra.mxu0 0
  %334 = vmatprep.subr.bf16.mxu0 0
  %335 = vmatpush1.bf16.msra.mxu0 0
  %336 = vmatprep.mubr.bf16.mxu0 0
  %337 = vmatmul.mubr.bf16.gmra.mrb[0].mxu0 %v293
  %v338 = vpop.f32.mrb[0].mxu0
  %v339 = vadd.f32 %v234, %v338
  %v340 = vpop.f32.mrb[0].mxu0
  %v341 = vpop.f32.mrb[0].mxu0
  %v342 = vadd.f32 %v239, %v341
  %v343 = vpop.f32.mrb[0].mxu0
  %344 = vmatprep.mubr.bf16.mxu0 0
  %345 = vmatmul.mubr.bf16.gmra.mrb[0].mxu0 %v296
  %v346 = vpop.f32.mrb[0].mxu0
  %v347 = vadd.f32 %v244, %v346
  %v348 = vpop.f32.mrb[0].mxu0
  %v349 = vpop.f32.mrb[0].mxu0
  %v350 = vadd.f32 %v249, %v349
  %v351 = vpop.f32.mrb[0].mxu0
  %352 = vmatprep.mubr.bf16.mxu0 0
  %353 = vmatmul.mubr.bf16.gmra.mrb[0].mxu0 %v299
  %v354 = vpop.f32.mrb[0].mxu0
  %v355 = vadd.f32 %v254, %v354
  %v356 = vpop.f32.mrb[0].mxu0
  %v357 = vpop.f32.mrb[0].mxu0
  %v358 = vadd.f32 %v259, %v357
  %v359 = vpop.f32.mrb[0].mxu0
  %360 = vmatprep.mubr.bf16.mxu0 0
  %361 = vmatmul.mubr.bf16.gmra.mrb[0].mxu0 %v302
  %v362 = vpop.f32.mrb[0].mxu0
  %v363 = vadd.f32 %v264, %v362
  %v364 = vpop.f32.mrb[0].mxu0
  %v365 = vpop.f32.mrb[0].mxu0
  %v366 = vadd.f32 %v269, %v365
  %v367 = vpop.f32.mrb[0].mxu0
  %368 = vdwg.mxu0
  %v369 = vmax.f32 %v339, 0.0
  %v370 = vmax.f32 %v342, 0.0
  %v371 = vmax.f32 %v347, 0.0
  %v372 = vmax.f32 %v350, 0.0
  %v373 = vmax.f32 %v355, 0.0
  %v374 = vmax.f32 %v358, 0.0
  %v375 = vmax.f32 %v363, 0.0
  %v376 = vmax.f32 %v366, 0.0
  %v377 = vpack.c.bf16 %v370, %v369
  %v378 = vpack.c.bf16 %v372, %v371
  %v379 = vpack.c.bf16 %v374, %v373
  %v380 = vpack.c.bf16 %v376, %v375
  %v381 = vld [vmem:[%s5] sm:$0xf]
  %v382 = vld [vmem:[%s6] sm:$0xff]
  %384 = vset.pattern.permute.xlu0 0
  %385 = vperm.xlu0 %384, %v382
  %v386 = vpop.permute.xlu0 %385
  %v389 = vsel %vm291, %v381, 0
  %391 = vmatprep.subr.bf16.mxu0 0
  %392 = vmatpush1.bf16.msra.mxu0 %v377
  %393 = vmatprep.subr.bf16.mxu0 0
  %394 = vmatpush1.bf16.msra.mxu0 %v378
  %395 = vmatprep.subr.bf16.mxu0 0
  %396 = vmatpush1.bf16.msra.mxu0 %v379
  %397 = vmatprep.subr.bf16.mxu0 0
  %398 = vmatpush1.bf16.msra.mxu0 %v380
  %399 = vmatprep.subr.bf16.mxu0 0
  %400 = vmatpush1.bf16.msra.mxu0 0
  %401 = vmatprep.subr.bf16.mxu0 0
  %402 = vmatpush1.bf16.msra.mxu0 0
  %403 = vmatprep.subr.bf16.mxu0 0
  %404 = vmatpush1.bf16.msra.mxu0 0
  %405 = vmatprep.subr.bf16.mxu0 0
  %406 = vmatpush1.bf16.msra.mxu0 0
  %407 = vmatprep.subr.bf16.mxu0 0
  %408 = vmatpush1.bf16.msra.mxu0 0
  %409 = vmatprep.subr.bf16.mxu0 0
  %410 = vmatpush1.bf16.msra.mxu0 0
  %411 = vmatprep.subr.bf16.mxu0 0
  %412 = vmatpush1.bf16.msra.mxu0 0
  %413 = vmatprep.subr.bf16.mxu0 0
  %414 = vmatpush1.bf16.msra.mxu0 0
  %415 = vmatprep.subr.bf16.mxu0 0
  %416 = vmatpush1.bf16.msra.mxu0 0
  %417 = vmatprep.subr.bf16.mxu0 0
  %418 = vmatpush1.bf16.msra.mxu0 0
  %419 = vmatprep.subr.bf16.mxu0 0
  %420 = vmatpush1.bf16.msra.mxu0 0
  %421 = vmatprep.subr.bf16.mxu0 0
  %422 = vmatpush1.bf16.msra.mxu0 0
  %423 = vmatprep.mubr.bf16.mxu0 0
  %424 = vmatmul.mubr.bf16.gmra.mrb[0].mxu0 %v389
  %v425 = vpop.f32.mrb[0].mxu0
  %v426 = vadd.f32 %v386, %v425
  %v427 = vpop.f32.mrb[0].mxu0
  %v428 = vpop.f32.mrb[0].mxu0
  %v429 = vpop.f32.mrb[0].mxu0
  %430 = vdwg.mxu0
  %431 = vst [vmem:[%s7] sm:$0xff] %v426
  // Predicated region
  $region30: #{_lambda_.1} parent=0 // pred_check
    _
  $region31: #{_lambda_.1} parent=0 // pred_check_branch
    %433 = sbr.rel (0) target = $region33
  $region32: #{_lambda_.1} parent=0 // pred_region
    _
  $region33: #{_lambda_.1} parent=0 // pred_fallthru
    _
  // Predicated region
  $region34: #{_lambda_.1} parent=0 // pred_check
    _
  $region35: #{_lambda_.1} parent=0 // pred_check_branch
    %435 = sbr.rel (0) target = $region37
  $region36: #{_lambda_.1} parent=0 // pred_region
    _
  $region37: #{_lambda_.1} parent=0 // pred_fallthru
    _

</llo_original>
